<compile_context>
chip_gen: v7x
topology: tpu7x:2x2x1
jax: 0.10.0
libtpu: 0.0.40
codegen_flags: <defaults>
</compile_context>

<pallas_src>
import jax
import jax.numpy as jnp
from jax.experimental import pallas as pl
from jax.experimental.pallas import tpu as pltpu

EPS = 1e-6


def _vn_leaky_relu_kernel(x_ref, wbig_ref, selr_ref, bcast_ref, o_ref):
    # x_ref:     (1, FC, TN)   native dtype
    # wbig_ref:  (FC, FC)      kron(W^T, I3), x.dtype
    # selr_ref:  (F,  FC)      kron(I_F, ones(1,3)), f32
    # bcast_ref: (FC, F )      (1 - slope) * kron(I_F, ones(3,1)), f32
    # o_ref:     (1, FC, TN)
    x = x_ref[0]                                                  # (FC, TN)

    # d_flat[g*3+c, n] = sum_f W[f, g] * x_flat[f*3+c, n]
    # One lane-dense MXU matmul; bf16 inputs use the bf16 MXU path, f32 accum.
    d = jnp.dot(wbig_ref[...], x, preferred_element_type=jnp.float32)

    xf = x.astype(jnp.float32)

    # Compact per-3-vector reductions -> (F, TN).  Contraction runs over
    # sublanes only, so lanes (N) stay independent (ragged tails stay local).
    dot_c = jnp.dot(selr_ref[...], xf * d, preferred_element_type=jnp.float32)
    nrm_c = jnp.dot(selr_ref[...], d * d, preferred_element_type=jnp.float32)

    denom = nrm_c + EPS
    inv = pl.reciprocal(denom, approx=True)                       # EUP slot
    inv = inv * (2.0 - denom * inv)                               # 1 Newton step -> ~f32 exact

    coeff = jnp.minimum(dot_c, 0.0) * inv                         # (F, TN)

    # Broadcast each group's coefficient back onto its 3 rows; the
    # (1 - negative_slope) scale rides on this matrix (applied after the min,
    # so it is valid for any slope value).
    coeff_b = jnp.dot(bcast_ref[...], coeff, preferred_element_type=jnp.float32)

    o_ref[0] = (xf - coeff_b * d).astype(o_ref.dtype)


def _vmem_capacity_bytes():
    """Physical per-core VMEM; conservative 64 MiB fallback (v7x)."""
    try:
        info = pltpu.get_tpu_info()
        cap = getattr(info, "vmem_capacity_bytes", None)
        if cap:
            return int(cap)
    except Exception:
        pass
    return 64 * 1024 * 1024


def _pick_tile_n(n, fc, itemsize, budget):
    """Lane-dim tile: fits `budget`, stays a multiple of 128 that divides N."""
    full = fc * n * itemsize
    if full <= budget:
        return n
    floor128 = max(128, (budget // (fc * itemsize)) // 128 * 128)
    if n % 128 != 0:
        # Ragged N: keep a single lane tile unless it clearly overflows VMEM
        # (a ragged last block would still be correct — garbage lanes stay
        # lane-local — but lane-dense full-N tiles are preferred).
        return n if full <= 4 * budget else floor128
    # Largest multiple of 128 that fits the budget AND divides N -> every grid
    # step's store is fully lane-dense / unmasked.
    tn = 128
    for cand in range(128, floor128 + 1, 128):
        if n % cand == 0:
            tn = cand
    return tn


def vn_leaky_relu(x, weight, negative_slope=0.2):
    """x: [B, F, 3, N] (PyTorch layout), weight: [F, F]. Returns [B, F, 3, N]."""
    B, F, C, N = x.shape
    FC = F * C
    itemsize = jnp.dtype(x.dtype).itemsize

    # Free reshape (merges adjacent row-major dims): N stays on the lane dim.
    x_flat = x.reshape(B, FC, N)

    # Small constant matrices encoding the per-3-vector structure.
    wf = weight.astype(jnp.float32)
    w_big = jnp.kron(wf.T, jnp.eye(C, dtype=jnp.float32)).astype(x.dtype)     # (FC, FC)
    sel_reduce = jnp.kron(jnp.eye(F, dtype=jnp.float32),
                          jnp.ones((1, C), dtype=jnp.float32))                # (F, FC)
    bcast = (1.0 - float(negative_slope)) * jnp.kron(
        jnp.eye(F, dtype=jnp.float32), jnp.ones((C, 1), dtype=jnp.float32))   # (FC, F)

    vmem_cap = _vmem_capacity_bytes()
    block_budget = (2 << 20) if vmem_cap <= (64 << 20) else (4 << 20)
    tn = _pick_tile_n(N, FC, itemsize, block_budget)
    grid = (B, pl.cdiv(N, tn))

    # VMEM budget: double-buffered in/out blocks + constants + in-kernel f32
    # temporaries (xf, d, x*d, d*d, compact rows, coeff_b, out), + slack.
    blk_bytes = FC * tn * itemsize
    blk_f32 = FC * tn * 4
    const_bytes = FC * FC * jnp.dtype(w_big.dtype).itemsize + 2 * F * FC * 4
    vmem_est = (2 * 2 * blk_bytes          # pipelined in + out
                + 7 * blk_f32              # kernel temporaries (f32)
                + 2 * const_bytes          # constants (double-buffered)
                + (4 << 20))               # slack for Mosaic internals
    upper = max(vmem_cap - (12 << 20), 16 << 20)   # always leave headroom
    vmem_limit = int(min(max(vmem_est, 32 << 20), upper))

    out_flat = pl.pallas_call(
        _vn_leaky_relu_kernel,
        out_shape=jax.ShapeDtypeStruct((B, FC, N), x.dtype),
        grid=grid,
        in_specs=[
            pl.BlockSpec((1, FC, tn), lambda b, j: (b, 0, j)),
            pl.BlockSpec((FC, FC), lambda b, j: (0, 0)),
            pl.BlockSpec((F, FC), lambda b, j: (0, 0)),
            pl.BlockSpec((FC, F), lambda b, j: (0, 0)),
        ],
        out_specs=pl.BlockSpec((1, FC, tn), lambda b, j: (b, 0, j)),
        compiler_params=pltpu.CompilerParams(
            dimension_semantics=("parallel", "parallel"),
            vmem_limit_bytes=vmem_limit),
    )(x_flat, w_big, sel_reduce, bcast)

    return out_flat.reshape(B, F, C, N)


def _reference(x, weight, negative_slope=0.2):
    # Pure-JAX mirror of the PyTorch forward, for verification.
    d = jnp.einsum('bfcn,fg->bgcn', x, weight)
    dotprod = jnp.sum(x * d, axis=2, keepdims=True)
    mask = (dotprod >= 0).astype(x.dtype)
    d_norm_sq = jnp.sum(d * d, axis=2, keepdims=True)
    a = negative_slope
    return a * x + (1 - a) * (mask * x +
                              (1 - mask) * (x - dotprod / (d_norm_sq + EPS) * d))


if __name__ == "__main__":
    key = jax.random.PRNGKey(0)
    k_x, k_w = jax.random.split(key)

    B, F, C, N = 2, 8, 3, 16
    negative_slope = 0.2

    x = jax.random.normal(k_x, (B, F, C, N), dtype=jnp.float32)
    # nn.init.uniform_(weight, -1/sqrt(F), 1/sqrt(F))
    bound = 1.0 / jnp.sqrt(jnp.float32(F))
    weight = jax.random.uniform(k_w, (F, F), dtype=jnp.float32,
                                minval=-bound, maxval=bound)

    out = vn_leaky_relu(x, weight, negative_slope)
    out = jax.block_until_ready(out)

    ref = _reference(x, weight, negative_slope)
    assert out.shape == (B, F, C, N)
    assert jnp.allclose(out, ref, atol=1e-4, rtol=1e-4), "mismatch vs reference"

    print("KERNEL_OK")
</pallas_src>

<mosaic_0001>
module attributes {stable_mosaic.version = 11 : i64} {
  func.func @_vn_leaky_relu_kernel(%arg0: i32, %arg1: i32, %arg2: memref<1x24x16xf32, #tpu.memory_space<vmem>>, %arg3: memref<24x24xf32, #tpu.memory_space<vmem>>, %arg4: memref<8x24xf32, #tpu.memory_space<vmem>>, %arg5: memref<24x8xf32, #tpu.memory_space<vmem>>, %arg6: memref<1x24x16xf32, #tpu.memory_space<vmem>>) attributes {dimension_semantics = [#tpu.dimension_semantics<parallel>, #tpu.dimension_semantics<parallel>], iteration_bounds = array<i64: 2, 1>, scalar_prefetch = 0 : i64, scratch_operands = 0 : i64, tpu.core_type = #tpu.core_type<tc>, window_params = [{transform_indices = @transform_0, window_bounds = array<i64: 1, 24, 16>}, {pipeline_mode = #tpu.pipeline_mode<synchronous>, transform_indices = @transform_1, window_bounds = array<i64: 24, 24>}, {pipeline_mode = #tpu.pipeline_mode<synchronous>, transform_indices = @transform_2, window_bounds = array<i64: 8, 24>}, {pipeline_mode = #tpu.pipeline_mode<synchronous>, transform_indices = @transform_3, window_bounds = array<i64: 24, 8>}, {transform_indices = @transform_4, window_bounds = array<i64: 1, 24, 16>}]} {
    %c0 = arith.constant 0 : index
    %c0_0 = arith.constant 0 : index
    %c0_1 = arith.constant 0 : index
    %0 = vector.load %arg2[%c0, %c0_0, %c0_1] : memref<1x24x16xf32, #tpu.memory_space<vmem>>, vector<1x24x16xf32>
    %1 = vector.shape_cast %0 : vector<1x24x16xf32> to vector<24x16xf32>
    %c0_2 = arith.constant 0 : index
    %c0_3 = arith.constant 0 : index
    %2 = vector.load %arg3[%c0_2, %c0_3] : memref<24x24xf32, #tpu.memory_space<vmem>>, vector<24x24xf32>
    %cst = arith.constant dense<0.000000e+00> : vector<24x16xf32>
    %3 = tpu.matmul %2, %1, %cst {dimension_numbers = #tpu.dot_dimension_numbers<[1], [0], [0], [1], [0, 0, 1, 1], [], []>} : vector<24x24xf32>, vector<24x16xf32>, vector<24x16xf32> -> vector<24x16xf32>
    %c0_4 = arith.constant 0 : index
    %c0_5 = arith.constant 0 : index
    %4 = vector.load %arg4[%c0_4, %c0_5] : memref<8x24xf32, #tpu.memory_space<vmem>>, vector<8x24xf32>
    %5 = arith.mulf %1, %3 : vector<24x16xf32>
    %cst_6 = arith.constant dense<0.000000e+00> : vector<8x16xf32>
    %6 = tpu.matmul %4, %5, %cst_6 {dimension_numbers = #tpu.dot_dimension_numbers<[1], [0], [0], [1], [0, 0, 1, 1], [], []>} : vector<8x24xf32>, vector<24x16xf32>, vector<8x16xf32> -> vector<8x16xf32>
    %c0_7 = arith.constant 0 : index
    %c0_8 = arith.constant 0 : index
    %7 = vector.load %arg4[%c0_7, %c0_8] : memref<8x24xf32, #tpu.memory_space<vmem>>, vector<8x24xf32>
    %8 = arith.mulf %3, %3 : vector<24x16xf32>
    %cst_9 = arith.constant dense<0.000000e+00> : vector<8x16xf32>
    %9 = tpu.matmul %7, %8, %cst_9 {dimension_numbers = #tpu.dot_dimension_numbers<[1], [0], [0], [1], [0, 0, 1, 1], [], []>} : vector<8x24xf32>, vector<24x16xf32>, vector<8x16xf32> -> vector<8x16xf32>
    %cst_10 = arith.constant 9.99999997E-7 : f32
    %10 = vector.broadcast %cst_10 : f32 to vector<8x16xf32>
    %11 = arith.addf %9, %10 : vector<8x16xf32>
    %12 = tpu.reciprocal %11 {approx = true} : vector<8x16xf32> -> vector<8x16xf32>
    %13 = arith.mulf %11, %12 : vector<8x16xf32>
    %cst_11 = arith.constant 2.000000e+00 : f32
    %14 = vector.broadcast %cst_11 : f32 to vector<8x16xf32>
    %15 = arith.subf %14, %13 : vector<8x16xf32>
    %16 = arith.mulf %12, %15 : vector<8x16xf32>
    %cst_12 = arith.constant 0.000000e+00 : f32
    %17 = vector.broadcast %cst_12 : f32 to vector<8x16xf32>
    %18 = arith.minimumf %6, %17 : vector<8x16xf32>
    %19 = arith.mulf %18, %16 : vector<8x16xf32>
    %c0_13 = arith.constant 0 : index
    %c0_14 = arith.constant 0 : index
    %20 = vector.load %arg5[%c0_13, %c0_14] : memref<24x8xf32, #tpu.memory_space<vmem>>, vector<24x8xf32>
    %cst_15 = arith.constant dense<0.000000e+00> : vector<24x16xf32>
    %21 = tpu.matmul %20, %19, %cst_15 {dimension_numbers = #tpu.dot_dimension_numbers<[1], [0], [0], [1], [0, 0, 1, 1], [], []>} : vector<24x8xf32>, vector<8x16xf32>, vector<24x16xf32> -> vector<24x16xf32>
    %22 = arith.mulf %21, %3 : vector<24x16xf32>
    %23 = arith.subf %1, %22 : vector<24x16xf32>
    %c0_16 = arith.constant 0 : index
    %c0_17 = arith.constant 0 : index
    %c0_18 = arith.constant 0 : index
    %24 = vector.load %arg6[%c0_16, %c0_17, %c0_18] : memref<1x24x16xf32, #tpu.memory_space<vmem>>, vector<1x24x16xf32>
    %25 = vector.shape_cast %24 : vector<1x24x16xf32> to vector<24x16xf32>
    %26 = vector.shape_cast %23 : vector<24x16xf32> to vector<1x24x16xf32>
    tpu.vector_store %arg6[%c0_16, %c0_17, %c0_18], %26 {strides = array<i32>} : memref<1x24x16xf32, #tpu.memory_space<vmem>>, vector<1x24x16xf32>,
    return
  }
  func.func @transform_0(%arg0: i32, %arg1: i32) -> (i32, i32, i32) {
    %c0_i32 = arith.constant 0 : i32
    %c0_i32_0 = arith.constant 0 : i32
    return %arg0, %c0_i32, %arg1 : i32, i32, i32
  }
  func.func @transform_1(%arg0: i32, %arg1: i32) -> (i32, i32) {
    %c0_i32 = arith.constant 0 : i32
    %c0_i32_0 = arith.constant 0 : i32
    %c0_i32_1 = arith.constant 0 : i32
    return %c0_i32, %c0_i32_0 : i32, i32
  }
  func.func @transform_2(%arg0: i32, %arg1: i32) -> (i32, i32) {
    %c0_i32 = arith.constant 0 : i32
    %c0_i32_0 = arith.constant 0 : i32
    %c0_i32_1 = arith.constant 0 : i32
    return %c0_i32, %c0_i32_0 : i32, i32
  }
  func.func @transform_3(%arg0: i32, %arg1: i32) -> (i32, i32) {
    %c0_i32 = arith.constant 0 : i32
    %c0_i32_0 = arith.constant 0 : i32
    %c0_i32_1 = arith.constant 0 : i32
    return %c0_i32, %c0_i32_0 : i32, i32
  }
  func.func @transform_4(%arg0: i32, %arg1: i32) -> (i32, i32, i32) {
    %c0_i32 = arith.constant 0 : i32
    %c0_i32_0 = arith.constant 0 : i32
    return %arg0, %c0_i32, %arg1 : i32, i32, i32
  }
}

</mosaic_0001>

<llo_original>
// kernel: tpu_custom_call.1
$region0: #{tpu_custom_call.1}
  #allocation0 [shape = 'u32[]', space=smem, size = 0x4, offset = 0x4, fixed_abs, tag = 'smem constant byte address 0x4 - core index']
  #allocation1 [shape = 'u32[144,128]{1,0:T(1,128)}', space=vmem, size = 0x12000, scoped, tag = 'internal scratch']
  %s0 = inlined_call_operand.vmem [shape: f32[2,24,16], index: 0, kind: input, shape index: {}]
  %s1 = inlined_call_operand.vmem [shape: f32[24,24], index: 1, kind: input, shape index: {}]
  %s2 = inlined_call_operand.vmem [shape: f32[8,24], index: 2, kind: input, shape index: {}]
  %s3 = inlined_call_operand.vmem [shape: f32[24,8], index: 3, kind: input, shape index: {}]
  %s4 = inlined_call_operand.vmem [shape: f32[2,24,16], index: 4, kind: output, shape index: {}]
  %s5 = sld [smem:[#allocation0]]
  $region49: #{tpu_custom_call.1} parent=0
    _
  %s7 = ssub.s32 1, %s5
  %s8 = scalar_select 0, %s7, %s5
  loop: start=0, step=1, limit=4
  $region2: #{tpu_custom_call.1} parent=0 // loop_pre_header
    _
  $region3: #{tpu_custom_call.1} parent=0 // loop_header
    %s10 = sphi 0, %s14
    %p11 = scmp.ge.s32.totalorder %s10, 4
    %s17 = sphi 0, %s29
    %s18 = sphi 0, %s25
    %s19 = sphi 0, %s17
    %s20 = sphi 0, %s18
    %s21 = sphi 0, %s19
    %s22 = sphi 0, %s20
    %s34 = sphi 0, %s36
    %s37 = sphi 0, %s34
    %s38 = sphi 0, %s37
    %s54 = sphi 0, %s38
    %s58 = sphi 0, %s58
    %s60 = sphi 0, %s58
    %s61 = sphi 0, %s60
    %s75 = sphi 0, %s61
    %s79 = sphi 0, %s79
    %s81 = sphi 0, %s79
    %s82 = sphi 0, %s81
    %s96 = sphi 0, %s82
    %s100 = sphi 0, %s100
    %s102 = sphi 0, %s100
    %s103 = sphi 0, %s102
    %s117 = sphi 0, %s103
    %s125 = sphi 0, %s127
    %s128 = sphi 0, %s125
    %s129 = sphi 0, %s128
    %s145 = sphi 0, %s129
  $region4: #{tpu_custom_call.1} parent=0 // loop_header_branch
    %13 = sbr.rel (%p11) target = $region8
  $region5: #{tpu_custom_call.1} parent=0 // loop_body
    %s15 = ssub.s32 %s10, 1
    %s16 = ssub.s32 %s10, 2
    %s23 = sadd.s32 1, %s18
    %p24 = scmp.ge.s32.totalorder %s23, 1
    %s25 = scalar_select %p24, 0, %s23
    %s26 = sadd.s32 1, %s17
    %s27 = scalar_select %p24, %s26, %s17
    %p28 = scmp.ge.s32.totalorder %s27, 2
    %s29 = scalar_select %p28, 0, %s27
    %s30 = ssub.s32 %s17, %s29
    %s31 = ssub.s32 %s18, %s25
    %s32 = sor.u32 %s30, %s31
    %p33 = scmp.eq.s32.totalorder %s32, 0
    %s35 = sadd.s32 %s34, 1
    %s36 = scalar_select %p33, %s34, %s35
    %p39 = pneg %p33
    %p40 = scmp.eq.s32.totalorder %s10, 1
    %p41 = por %p39, %p40
    %p42 = scmp.ne.s32.totalorder %s34, %s37
    %p43 = scmp.eq.s32.totalorder %s10, 0
    %p44 = por %p42, %p43
    %p45 = scmp.ne.s32.totalorder %s34, %s37
    %p46 = scmp.eq.s32.totalorder %s15, 1
    %p47 = por %p45, %p46
    %p48 = scmp.ne.s32.totalorder %s37, %s38
    %p49 = scmp.eq.s32.totalorder %s15, 0
    %p50 = por %p48, %p49
    %p51 = scmp.ne.s32.totalorder %s37, %s38
    %p52 = scmp.eq.s32.totalorder %s16, 1
    %p53 = por %p51, %p52
    %p55 = scmp.ne.s32.totalorder %s38, %s54
    %p56 = scmp.eq.s32.totalorder %s16, 0
    %p57 = por %p55, %p56
    %s59 = sadd.s32 %s58, 1
    %p62 = scmp.eq.s32.totalorder %s10, 1
    %p63 = scmp.ne.s32.totalorder %s58, %s60
    %p64 = scmp.eq.s32.totalorder %s10, 0
    %p65 = por %p63, %p64
    %p66 = scmp.ne.s32.totalorder %s58, %s60
    %p67 = scmp.eq.s32.totalorder %s15, 1
    %p68 = por %p66, %p67
    %p69 = scmp.ne.s32.totalorder %s60, %s61
    %p70 = scmp.eq.s32.totalorder %s15, 0
    %p71 = por %p69, %p70
    %p72 = scmp.ne.s32.totalorder %s60, %s61
    %p73 = scmp.eq.s32.totalorder %s16, 1
    %p74 = por %p72, %p73
    %p76 = scmp.ne.s32.totalorder %s61, %s75
    %p77 = scmp.eq.s32.totalorder %s16, 0
    %p78 = por %p76, %p77
    %s80 = sadd.s32 %s79, 1
    %p83 = scmp.eq.s32.totalorder %s10, 1
    %p84 = scmp.ne.s32.totalorder %s79, %s81
    %p85 = scmp.eq.s32.totalorder %s10, 0
    %p86 = por %p84, %p85
    %p87 = scmp.ne.s32.totalorder %s79, %s81
    %p88 = scmp.eq.s32.totalorder %s15, 1
    %p89 = por %p87, %p88
    %p90 = scmp.ne.s32.totalorder %s81, %s82
    %p91 = scmp.eq.s32.totalorder %s15, 0
    %p92 = por %p90, %p91
    %p93 = scmp.ne.s32.totalorder %s81, %s82
    %p94 = scmp.eq.s32.totalorder %s16, 1
    %p95 = por %p93, %p94
    %p97 = scmp.ne.s32.totalorder %s82, %s96
    %p98 = scmp.eq.s32.totalorder %s16, 0
    %p99 = por %p97, %p98
    %s101 = sadd.s32 %s100, 1
    %p104 = scmp.eq.s32.totalorder %s10, 1
    %p105 = scmp.ne.s32.totalorder %s100, %s102
    %p106 = scmp.eq.s32.totalorder %s10, 0
    %p107 = por %p105, %p106
    %p108 = scmp.ne.s32.totalorder %s100, %s102
    %p109 = scmp.eq.s32.totalorder %s15, 1
    %p110 = por %p108, %p109
    %p111 = scmp.ne.s32.totalorder %s102, %s103
    %p112 = scmp.eq.s32.totalorder %s15, 0
    %p113 = por %p111, %p112
    %p114 = scmp.ne.s32.totalorder %s102, %s103
    %p115 = scmp.eq.s32.totalorder %s16, 1
    %p116 = por %p114, %p115
    %p118 = scmp.ne.s32.totalorder %s103, %s117
    %p119 = scmp.eq.s32.totalorder %s16, 0
    %p120 = por %p118, %p119
    %s121 = ssub.s32 %s17, %s29
    %s122 = ssub.s32 %s18, %s25
    %s123 = sor.u32 %s121, %s122
    %p124 = scmp.eq.s32.totalorder %s123, 0
    %s126 = sadd.s32 %s125, 1
    %s127 = scalar_select %p124, %s125, %s126
    %p130 = pneg %p124
    %p131 = scmp.eq.s32.totalorder %s10, 1
    %p132 = por %p130, %p131
    %p133 = scmp.ne.s32.totalorder %s125, %s128
    %p134 = scmp.eq.s32.totalorder %s10, 0
    %p135 = por %p133, %p134
    %p136 = scmp.ne.s32.totalorder %s125, %s128
    %p137 = scmp.eq.s32.totalorder %s15, 1
    %p138 = por %p136, %p137
    %p139 = scmp.ne.s32.totalorder %s128, %s129
    %p140 = scmp.eq.s32.totalorder %s15, 0
    %p141 = por %p139, %p140
    %p142 = scmp.ne.s32.totalorder %s128, %s129
    %p143 = scmp.eq.s32.totalorder %s16, 1
    %p144 = por %p142, %p143
    %p146 = scmp.ne.s32.totalorder %s129, %s145
    %p147 = scmp.eq.s32.totalorder %s16, 0
    %p148 = por %p146, %p147
    %p149 = scmp.le.s32.totalorder 1, %s10
    %p150 = scmp.lt.s32.totalorder %s10, 3
    %p151 = pnand %p149, %p150
    %p152 = pneg %p151
    // Predicated region
    $region9: #{tpu_custom_call.1} parent=5 // pred_check
      _
    $region10: #{tpu_custom_call.1} parent=5 // pred_check_branch
      %154 = sbr.rel (%p151) target = $region12
    $region11: #{tpu_custom_call.1} parent=5 // pred_region
      %s155 = ssub.s32 %s10, 1
      // Predicated region
      $region13: #{tpu_custom_call.1} parent=11 // pred_check
        %p156 = pneg %p71
      $region14: #{tpu_custom_call.1} parent=11 // pred_check_branch
        %158 = sbr.rel (%p156) target = $region16
      $region15: #{tpu_custom_call.1} parent=11 // pred_region
        _
      $region16: #{tpu_custom_call.1} parent=11 // pred_fallthru
        _
      // Predicated region
      $region17: #{tpu_custom_call.1} parent=11 // pred_check
        %p159 = pneg %p92
      $region18: #{tpu_custom_call.1} parent=11 // pred_check_branch
        %161 = sbr.rel (%p159) target = $region20
      $region19: #{tpu_custom_call.1} parent=11 // pred_region
        _
      $region20: #{tpu_custom_call.1} parent=11 // pred_fallthru
        _
      // Predicated region
      $region21: #{tpu_custom_call.1} parent=11 // pred_check
        %p162 = pneg %p113
      $region22: #{tpu_custom_call.1} parent=11 // pred_check_branch
        %164 = sbr.rel (%p162) target = $region24
      $region23: #{tpu_custom_call.1} parent=11 // pred_region
        _
      $region24: #{tpu_custom_call.1} parent=11 // pred_fallthru
        _
    $region12: #{tpu_custom_call.1} parent=5 // pred_fallthru
      _
    %p165 = scmp.lt.s32.totalorder %s10, 2
    // Predicated region
    $region25: #{tpu_custom_call.1} parent=5 // pred_check
      %p166 = pneg %p165
    $region26: #{tpu_custom_call.1} parent=5 // pred_check_branch
      %168 = sbr.rel (%p166) target = $region28
    $region27: #{tpu_custom_call.1} parent=5 // pred_region
      // Predicated region
      $region29: #{tpu_custom_call.1} parent=27 // pred_check
        %p169 = pneg %p44
      $region30: #{tpu_custom_call.1} parent=27 // pred_check_branch
        %171 = sbr.rel (%p169) target = $region32
      $region31: #{tpu_custom_call.1} parent=27 // pred_region
        %p172 = scmp.lt.s32.totalorder %s17, 1
        %s173 = scalar_select %p172, %s17, 1
        %p174 = scmp.lt.s32.totalorder %s18, 0
        %s175 = scalar_select %p174, %s18, 0
        %s176 = smul.addr %s173, 3
        %s177 = sadd.s32 %s175, %s176
        %s178 = smul.addr %s177, 8
        %s179 = scalar_lea.vmem %s0, %s178
      $region32: #{tpu_custom_call.1} parent=27 // pred_fallthru
        _
    $region28: #{tpu_custom_call.1} parent=5 // pred_fallthru
      _
    %p180 = scmp.le.s32.totalorder 1, %s10
    %p181 = scmp.lt.s32.totalorder %s10, 3
    %p182 = pnand %p180, %p181
    %p183 = pneg %p182
    // Predicated region
    $region33: #{tpu_custom_call.1} parent=5 // pred_check
      _
    $region34: #{tpu_custom_call.1} parent=5 // pred_check_branch
      %185 = sbr.rel (%p182) target = $region36
    $region35: #{tpu_custom_call.1} parent=5 // pred_region
      %s186 = ssub.s32 %s10, 1
      %p187 = scmp.lt.s32.totalorder %s19, 1
      %s188 = scalar_select %p187, %s19, 1
      %p189 = scmp.lt.s32.totalorder %s20, 0
      %s190 = scalar_select %p189, %s20, 0
      %s191 = smul.addr %s188, 3
      %s192 = sadd.s32 %s190, %s191
      %s193 = smul.addr %s192, 8
      %s194 = scalar_lea.vmem %s0, %s193
      %p195 = pneg %p50
      %p196 = pneg %p47
      %p197 = pneg %p71
      %p198 = pneg %p68
      %p199 = pneg %p92
      %p200 = pneg %p89
      %p201 = pneg %p113
      %p202 = pneg %p110
      %p203 = pneg %p141
      %p204 = pneg %p138
      %p205 = scmp.lt.s32.totalorder %s19, 1
      %s206 = scalar_select %p205, %s19, 1
      %p207 = scmp.lt.s32.totalorder %s20, 0
      %s208 = scalar_select %p207, %s20, 0
      %s209 = smul.addr %s206, 3
      %s210 = sadd.s32 %s208, %s209
      %s211 = smul.addr %s210, 8
      %s212 = scalar_lea.vmem %s4, %s211
      %p213 = scmp.lt.s32.totalorder %s19, 1
      %s214 = scalar_select %p213, %s19, 1
      %p215 = scmp.lt.s32.totalorder %s20, 0
      %s216 = scalar_select %p215, %s20, 0
      %s217 = smul.addr %s214, 3
      %s218 = sadd.s32 %s216, %s217
      %s219 = smul.addr %s218, 8
      %s220 = scalar_lea.vmem %s0, %s219
      %p221 = scmp.lt.s32.totalorder %s19, 1
      %s222 = scalar_select %p221, %s19, 1
      %p223 = scmp.lt.s32.totalorder %s20, 0
      %s224 = scalar_select %p223, %s20, 0
      %s225 = smul.addr %s222, 3
      %s226 = sadd.s32 %s224, %s225
      %s227 = smul.addr %s226, 8
      %s228 = scalar_lea.vmem %s4, %s227
      %v229 = vld [vmem:[%s220] sm:$0xff]
      %v230 = vld [vmem:[%s220 + $0x8] sm:$0xff]
      %v231 = vld [vmem:[%s220 + $0x10] sm:$0xff]
      %v232 = vld [vmem:[%s1] sm:$0xff]
      %v233 = vld [vmem:[%s1 + $0x8] sm:$0xff]
      %v234 = vld [vmem:[%s1 + $0x10] sm:$0xff]
      %vm235 = vcmask 195584
      %v237 = vsel %vm235, %v232, 0
      %v240 = vsel %vm235, %v233, 0
      %v243 = vsel %vm235, %v234, 0
      %245 = vmatprep.subr.mxu0 0.0
      %246 = vmatpush1.msra.mxu0 %v229
      %247 = vmatprep.subr.mxu0 0.0
      %248 = vmatpush1.msra.mxu0 %v230
      %249 = vmatprep.subr.mxu0 0.0
      %250 = vmatpush1.msra.mxu0 %v231
      %251 = vmatprep.subr.mxu0 0.0
      %252 = vmatpush1.msra.mxu0 0.0
      %253 = vmatprep.subr.mxu0 0.0
      %254 = vmatpush1.msra.mxu0 0.0
      %255 = vmatprep.subr.mxu0 0.0
      %256 = vmatpush1.msra.mxu0 0.0
      %257 = vmatprep.subr.mxu0 0.0
      %258 = vmatpush1.msra.mxu0 0.0
      %259 = vmatprep.subr.mxu0 0.0
      %260 = vmatpush1.msra.mxu0 0.0
      %261 = vmatprep.subr.mxu0 0.0
      %262 = vmatpush1.msra.mxu0 0.0
      %263 = vmatprep.subr.mxu0 0.0
      %264 = vmatpush1.msra.mxu0 0.0
      %265 = vmatprep.subr.mxu0 0.0
      %266 = vmatpush1.msra.mxu0 0.0
      %267 = vmatprep.subr.mxu0 0.0
      %268 = vmatpush1.msra.mxu0 0.0
      %269 = vmatprep.subr.mxu0 0.0
      %270 = vmatpush1.msra.mxu0 0.0
      %271 = vmatprep.subr.mxu0 0.0
      %272 = vmatpush1.msra.mxu0 0.0
      %273 = vmatprep.subr.mxu0 0.0
      %274 = vmatpush1.msra.mxu0 0.0
      %275 = vmatprep.subr.mxu0 0.0
      %276 = vmatpush1.msra.mxu0 0.0
      %277 = vmatprep.subr.mxu0 0.0
      %278 = vmatpush1.msra.mxu0 0.0
      %279 = vmatprep.subr.mxu0 0.0
      %280 = vmatpush1.msra.mxu0 0.0
      %281 = vmatprep.subr.mxu0 0.0
      %282 = vmatpush1.msra.mxu0 0.0
      %283 = vmatprep.subr.mxu0 0.0
      %284 = vmatpush1.msra.mxu0 0.0
      %285 = vmatprep.subr.mxu0 0.0
      %286 = vmatpush1.msra.mxu0 0.0
      %287 = vmatprep.subr.mxu0 0.0
      %288 = vmatpush1.msra.mxu0 0.0
      %289 = vmatprep.subr.mxu0 0.0
      %290 = vmatpush1.msra.mxu0 0.0
      %291 = vmatprep.subr.mxu0 0.0
      %292 = vmatpush1.msra.mxu0 0.0
      %293 = vmatprep.subr.mxu0 0.0
      %294 = vmatpush1.msra.mxu0 0.0
      %295 = vmatprep.subr.mxu0 0.0
      %296 = vmatpush1.msra.mxu0 0.0
      %297 = vmatprep.subr.mxu0 0.0
      %298 = vmatpush1.msra.mxu0 0.0
      %299 = vmatprep.subr.mxu0 0.0
      %300 = vmatpush1.msra.mxu0 0.0
      %301 = vmatprep.subr.mxu0 0.0
      %302 = vmatpush1.msra.mxu0 0.0
      %303 = vmatprep.subr.mxu0 0.0
      %304 = vmatpush1.msra.mxu0 0.0
      %305 = vmatprep.subr.mxu0 0.0
      %306 = vmatpush1.msra.mxu0 0.0
      %307 = vmatprep.subr.mxu0 0.0
      %308 = vmatpush1.msra.mxu0 0.0
      %309 = vmatprep.mubr.f32.mxu0 0.0
      %310 = vmatmul.mubr.f32.gmra.mrb[0].mxu0 %v237
      %v311 = vpop.f32.mrb[0].mxu0
      %v312 = vadd.f32 0.0, %v311
      %v313 = vpop.f32.mrb[0].mxu0
      %314 = vmatprep.mubr.f32.mxu0 0.0
      %315 = vmatmul.mubr.f32.gmra.mrb[0].mxu0 %v240
      %v316 = vpop.f32.mrb[0].mxu0
      %v317 = vadd.f32 0.0, %v316
      %v318 = vpop.f32.mrb[0].mxu0
      %319 = vmatprep.mubr.f32.mxu0 0.0
      %320 = vmatmul.mubr.f32.gmra.mrb[0].mxu0 %v243
      %v321 = vpop.f32.mrb[0].mxu0
      %v322 = vadd.f32 0.0, %v321
      %v323 = vpop.f32.mrb[0].mxu0
      %324 = vdwg.mxu0
      %v325 = vld [vmem:[%s2] sm:$0xff]
      %v326 = vmul.f32 %v229, %v312
      %v327 = vmul.f32 %v230, %v317
      %v328 = vmul.f32 %v231, %v322
      %v330 = vsel %vm235, %v325, 0
      %332 = vmatprep.subr.mxu0 0.0
      %333 = vmatpush1.msra.mxu0 %v326
      %334 = vmatprep.subr.mxu0 0.0
      %335 = vmatpush1.msra.mxu0 %v327
      %336 = vmatprep.subr.mxu0 0.0
      %337 = vmatpush1.msra.mxu0 %v328
      %338 = vmatprep.subr.mxu0 0.0
      %339 = vmatpush1.msra.mxu0 0.0
      %340 = vmatprep.subr.mxu0 0.0
      %341 = vmatpush1.msra.mxu0 0.0
      %342 = vmatprep.subr.mxu0 0.0
      %343 = vmatpush1.msra.mxu0 0.0
      %344 = vmatprep.subr.mxu0 0.0
      %345 = vmatpush1.msra.mxu0 0.0
      %346 = vmatprep.subr.mxu0 0.0
      %347 = vmatpush1.msra.mxu0 0.0
      %348 = vmatprep.subr.mxu0 0.0
      %349 = vmatpush1.msra.mxu0 0.0
      %350 = vmatprep.subr.mxu0 0.0
      %351 = vmatpush1.msra.mxu0 0.0
      %352 = vmatprep.subr.mxu0 0.0
      %353 = vmatpush1.msra.mxu0 0.0
      %354 = vmatprep.subr.mxu0 0.0
      %355 = vmatpush1.msra.mxu0 0.0
      %356 = vmatprep.subr.mxu0 0.0
      %357 = vmatpush1.msra.mxu0 0.0
      %358 = vmatprep.subr.mxu0 0.0
      %359 = vmatpush1.msra.mxu0 0.0
      %360 = vmatprep.subr.mxu0 0.0
      %361 = vmatpush1.msra.mxu0 0.0
      %362 = vmatprep.subr.mxu0 0.0
      %363 = vmatpush1.msra.mxu0 0.0
      %364 = vmatprep.subr.mxu0 0.0
      %365 = vmatpush1.msra.mxu0 0.0
      %366 = vmatprep.subr.mxu0 0.0
      %367 = vmatpush1.msra.mxu0 0.0
      %368 = vmatprep.subr.mxu0 0.0
      %369 = vmatpush1.msra.mxu0 0.0
      %370 = vmatprep.subr.mxu0 0.0
      %371 = vmatpush1.msra.mxu0 0.0
      %372 = vmatprep.subr.mxu0 0.0
      %373 = vmatpush1.msra.mxu0 0.0
      %374 = vmatprep.subr.mxu0 0.0
      %375 = vmatpush1.msra.mxu0 0.0
      %376 = vmatprep.subr.mxu0 0.0
      %377 = vmatpush1.msra.mxu0 0.0
      %378 = vmatprep.subr.mxu0 0.0
      %379 = vmatpush1.msra.mxu0 0.0
      %380 = vmatprep.subr.mxu0 0.0
      %381 = vmatpush1.msra.mxu0 0.0
      %382 = vmatprep.subr.mxu0 0.0
      %383 = vmatpush1.msra.mxu0 0.0
      %384 = vmatprep.subr.mxu0 0.0
      %385 = vmatpush1.msra.mxu0 0.0
      %386 = vmatprep.subr.mxu0 0.0
      %387 = vmatpush1.msra.mxu0 0.0
      %388 = vmatprep.subr.mxu0 0.0
      %389 = vmatpush1.msra.mxu0 0.0
      %390 = vmatprep.subr.mxu0 0.0
      %391 = vmatpush1.msra.mxu0 0.0
      %392 = vmatprep.subr.mxu0 0.0
      %393 = vmatpush1.msra.mxu0 0.0
      %394 = vmatprep.subr.mxu0 0.0
      %395 = vmatpush1.msra.mxu0 0.0
      %396 = vmatprep.mubr.f32.mxu0 0.0
      %397 = vmatmul.mubr.f32.gmra.mrb[0].mxu0 %v330
      %v398 = vpop.f32.mrb[0].mxu0
      %v399 = vadd.f32 0.0, %v398
      %v400 = vpop.f32.mrb[0].mxu0
      %401 = vdwg.mxu0
      %v402 = vmul.f32 %v312, %v312
      %v403 = vmul.f32 %v317, %v317
      %v404 = vmul.f32 %v322, %v322
      %405 = vmatprep.subr.mxu0 0.0
      %406 = vmatpush1.msra.mxu0 %v402
      %407 = vmatprep.subr.mxu0 0.0
      %408 = vmatpush1.msra.mxu0 %v403
      %409 = vmatprep.subr.mxu0 0.0
      %410 = vmatpush1.msra.mxu0 %v404
      %411 = vmatprep.subr.mxu0 0.0
      %412 = vmatpush1.msra.mxu0 0.0
      %413 = vmatprep.subr.mxu0 0.0
      %414 = vmatpush1.msra.mxu0 0.0
      %415 = vmatprep.subr.mxu0 0.0
      %416 = vmatpush1.msra.mxu0 0.0
      %417 = vmatprep.subr.mxu0 0.0
      %418 = vmatpush1.msra.mxu0 0.0
      %419 = vmatprep.subr.mxu0 0.0
      %420 = vmatpush1.msra.mxu0 0.0
      %421 = vmatprep.subr.mxu0 0.0
      %422 = vmatpush1.msra.mxu0 0.0
      %423 = vmatprep.subr.mxu0 0.0
      %424 = vmatpush1.msra.mxu0 0.0
      %425 = vmatprep.subr.mxu0 0.0
      %426 = vmatpush1.msra.mxu0 0.0
      %427 = vmatprep.subr.mxu0 0.0
      %428 = vmatpush1.msra.mxu0 0.0
      %429 = vmatprep.subr.mxu0 0.0
      %430 = vmatpush1.msra.mxu0 0.0
      %431 = vmatprep.subr.mxu0 0.0
      %432 = vmatpush1.msra.mxu0 0.0
      %433 = vmatprep.subr.mxu0 0.0
      %434 = vmatpush1.msra.mxu0 0.0
      %435 = vmatprep.subr.mxu0 0.0
      %436 = vmatpush1.msra.mxu0 0.0
      %437 = vmatprep.subr.mxu0 0.0
      %438 = vmatpush1.msra.mxu0 0.0
      %439 = vmatprep.subr.mxu0 0.0
      %440 = vmatpush1.msra.mxu0 0.0
      %441 = vmatprep.subr.mxu0 0.0
      %442 = vmatpush1.msra.mxu0 0.0
      %443 = vmatprep.subr.mxu0 0.0
      %444 = vmatpush1.msra.mxu0 0.0
      %445 = vmatprep.subr.mxu0 0.0
      %446 = vmatpush1.msra.mxu0 0.0
      %447 = vmatprep.subr.mxu0 0.0
      %448 = vmatpush1.msra.mxu0 0.0
      %449 = vmatprep.subr.mxu0 0.0
      %450 = vmatpush1.msra.mxu0 0.0
      %451 = vmatprep.subr.mxu0 0.0
      %452 = vmatpush1.msra.mxu0 0.0
      %453 = vmatprep.subr.mxu0 0.0
      %454 = vmatpush1.msra.mxu0 0.0
      %455 = vmatprep.subr.mxu0 0.0
      %456 = vmatpush1.msra.mxu0 0.0
      %457 = vmatprep.subr.mxu0 0.0
      %458 = vmatpush1.msra.mxu0 0.0
      %459 = vmatprep.subr.mxu0 0.0
      %460 = vmatpush1.msra.mxu0 0.0
      %461 = vmatprep.subr.mxu0 0.0
      %462 = vmatpush1.msra.mxu0 0.0
      %463 = vmatprep.subr.mxu0 0.0
      %464 = vmatpush1.msra.mxu0 0.0
      %465 = vmatprep.subr.mxu0 0.0
      %466 = vmatpush1.msra.mxu0 0.0
      %467 = vmatprep.subr.mxu0 0.0
      %468 = vmatpush1.msra.mxu0 0.0
      %469 = vmatprep.mubr.f32.mxu0 0.0
      %470 = vmatmul.mubr.f32.gmra.mrb[0].mxu0 %v330
      %v471 = vpop.f32.mrb[0].mxu0
      %v472 = vadd.f32 1e-06, %v471
      %v473 = vpop.f32.mrb[0].mxu0
      %474 = vdwg.mxu0
      %v475 = vrcp.pop %v472
      %v476 = vmul.f32 %v472, %v475
      %v477 = vsub.f32 2.0, %v476
      %v478 = vmul.f32 %v475, %v477
      %v479 = vmin.f32 %v399, 0.0
      %v480 = vmul.f32 %v479, %v478
      %v481 = vld [vmem:[%s3] sm:$0xff]
      %v482 = vld [vmem:[%s3 + $0x8] sm:$0xff]
      %v483 = vld [vmem:[%s3 + $0x10] sm:$0xff]
      %vm484 = vcmask 64512
      %v486 = vsel %vm484, %v481, 0
      %v489 = vsel %vm484, %v482, 0
      %v492 = vsel %vm484, %v483, 0
      %494 = vmatprep.subr.mxu0 0.0
      %495 = vmatpush1.msra.mxu0 %v480
      %496 = vmatprep.subr.mxu0 0.0
      %497 = vmatpush1.msra.mxu0 0.0
      %498 = vmatprep.subr.mxu0 0.0
      %499 = vmatpush1.msra.mxu0 0.0
      %500 = vmatprep.subr.mxu0 0.0
      %501 = vmatpush1.msra.mxu0 0.0
      %502 = vmatprep.subr.mxu0 0.0
      %503 = vmatpush1.msra.mxu0 0.0
      %504 = vmatprep.subr.mxu0 0.0
      %505 = vmatpush1.msra.mxu0 0.0
      %506 = vmatprep.subr.mxu0 0.0
      %507 = vmatpush1.msra.mxu0 0.0
      %508 = vmatprep.subr.mxu0 0.0
      %509 = vmatpush1.msra.mxu0 0.0
      %510 = vmatprep.subr.mxu0 0.0
      %511 = vmatpush1.msra.mxu0 0.0
      %512 = vmatprep.subr.mxu0 0.0
      %513 = vmatpush1.msra.mxu0 0.0
      %514 = vmatprep.subr.mxu0 0.0
      %515 = vmatpush1.msra.mxu0 0.0
      %516 = vmatprep.subr.mxu0 0.0
      %517 = vmatpush1.msra.mxu0 0.0
      %518 = vmatprep.subr.mxu0 0.0
      %519 = vmatpush1.msra.mxu0 0.0
      %520 = vmatprep.subr.mxu0 0.0
      %521 = vmatpush1.msra.mxu0 0.0
      %522 = vmatprep.subr.mxu0 0.0
      %523 = vmatpush1.msra.mxu0 0.0
      %524 = vmatprep.subr.mxu0 0.0
      %525 = vmatpush1.msra.mxu0 0.0
      %526 = vmatprep.subr.mxu0 0.0
      %527 = vmatpush1.msra.mxu0 0.0
      %528 = vmatprep.subr.mxu0 0.0
      %529 = vmatpush1.msra.mxu0 0.0
      %530 = vmatprep.subr.mxu0 0.0
      %531 = vmatpush1.msra.mxu0 0.0
      %532 = vmatprep.subr.mxu0 0.0
      %533 = vmatpush1.msra.mxu0 0.0
      %534 = vmatprep.subr.mxu0 0.0
      %535 = vmatpush1.msra.mxu0 0.0
      %536 = vmatprep.subr.mxu0 0.0
      %537 = vmatpush1.msra.mxu0 0.0
      %538 = vmatprep.subr.mxu0 0.0
      %539 = vmatpush1.msra.mxu0 0.0
      %540 = vmatprep.subr.mxu0 0.0
      %541 = vmatpush1.msra.mxu0 0.0
      %542 = vmatprep.subr.mxu0 0.0
      %543 = vmatpush1.msra.mxu0 0.0
      %544 = vmatprep.subr.mxu0 0.0
      %545 = vmatpush1.msra.mxu0 0.0
      %546 = vmatprep.subr.mxu0 0.0
      %547 = vmatpush1.msra.mxu0 0.0
      %548 = vmatprep.subr.mxu0 0.0
      %549 = vmatpush1.msra.mxu0 0.0
      %550 = vmatprep.subr.mxu0 0.0
      %551 = vmatpush1.msra.mxu0 0.0
      %552 = vmatprep.subr.mxu0 0.0
      %553 = vmatpush1.msra.mxu0 0.0
      %554 = vmatprep.subr.mxu0 0.0
      %555 = vmatpush1.msra.mxu0 0.0
      %556 = vmatprep.subr.mxu0 0.0
      %557 = vmatpush1.msra.mxu0 0.0
      %558 = vmatprep.mubr.f32.mxu0 0.0
      %559 = vmatmul.mubr.f32.gmra.mrb[0].mxu0 %v486
      %v560 = vpop.f32.mrb[0].mxu0
      %v561 = vadd.f32 0.0, %v560
      %v562 = vpop.f32.mrb[0].mxu0
      %563 = vmatprep.mubr.f32.mxu0 0.0
      %564 = vmatmul.mubr.f32.gmra.mrb[0].mxu0 %v489
      %v565 = vpop.f32.mrb[0].mxu0
      %v566 = vadd.f32 0.0, %v565
      %v567 = vpop.f32.mrb[0].mxu0
      %568 = vmatprep.mubr.f32.mxu0 0.0
      %569 = vmatmul.mubr.f32.gmra.mrb[0].mxu0 %v492
      %v570 = vpop.f32.mrb[0].mxu0
      %v571 = vadd.f32 0.0, %v570
      %v572 = vpop.f32.mrb[0].mxu0
      %573 = vdwg.mxu0
      %v574 = vmul.f32 %v561, %v312
      %v575 = vmul.f32 %v566, %v317
      %v576 = vmul.f32 %v571, %v322
      %v577 = vsub.f32 %v229, %v574
      %v578 = vsub.f32 %v230, %v575
      %v579 = vsub.f32 %v231, %v576
      %vm580 = vcmask 130048
      %581 = vst.msk [vmem:[%s228] sm:$0xff] %vm580, %v577
      %582 = vst.msk [vmem:[%s228 + $0x8] sm:$0xff] %vm580, %v578
      %583 = vst.msk [vmem:[%s228 + $0x10] sm:$0xff] %vm580, %v579
      %p584 = scmp.lt.s32.totalorder %s19, 1
      %s585 = scalar_select %p584, %s19, 1
      %p586 = scmp.lt.s32.totalorder %s20, 0
      %s587 = scalar_select %p586, %s20, 0
      %s588 = smul.addr %s585, 3
      %s589 = sadd.s32 %s587, %s588
      %s590 = smul.addr %s589, 8
      %s591 = scalar_lea.vmem %s4, %s590
      // Predicated region
      $region37: #{tpu_custom_call.1} parent=35 // pred_check
        %p592 = pneg %p138
      $region38: #{tpu_custom_call.1} parent=35 // pred_check_branch
        %594 = sbr.rel (%p592) target = $region40
      $region39: #{tpu_custom_call.1} parent=35 // pred_region
        _
      $region40: #{tpu_custom_call.1} parent=35 // pred_fallthru
        _
    $region36: #{tpu_custom_call.1} parent=5 // pred_fallthru
      _
    %p595 = scmp.le.s32.totalorder 2, %s10
    // Predicated region
    $region41: #{tpu_custom_call.1} parent=5 // pred_check
      %p596 = pneg %p595
    $region42: #{tpu_custom_call.1} parent=5 // pred_check_branch
      %598 = sbr.rel (%p596) target = $region44
    $region43: #{tpu_custom_call.1} parent=5 // pred_region
      %s599 = ssub.s32 %s10, 2
      // Predicated region
      $region45: #{tpu_custom_call.1} parent=43 // pred_check
        %p600 = pneg %p144
      $region46: #{tpu_custom_call.1} parent=43 // pred_check_branch
        %602 = sbr.rel (%p600) target = $region48
      $region47: #{tpu_custom_call.1} parent=43 // pred_region
        %p603 = scmp.lt.s32.totalorder %s21, 1
        %s604 = scalar_select %p603, %s21, 1
        %p605 = scmp.lt.s32.totalorder %s22, 0
        %s606 = scalar_select %p605, %s22, 0
        %s607 = smul.addr %s604, 3
        %s608 = sadd.s32 %s606, %s607
        %s609 = smul.addr %s608, 8
        %s610 = scalar_lea.vmem %s4, %s609
      $region48: #{tpu_custom_call.1} parent=43 // pred_fallthru
        _
    $region44: #{tpu_custom_call.1} parent=5 // pred_fallthru
      _
  $region6: #{tpu_custom_call.1} parent=0 // loop_footer
    %s14 = sadd.s32 1, %s10
  $region7: #{tpu_custom_call.1} parent=0 // loop_footer_branch
    %9 = sbr.rel target = $region3
  $region8: #{tpu_custom_call.1} parent=0 // loop_exit
    _

</llo_original>
